<compile_context>
chip_gen: v6e
topology: v6e:2x2x1
jax: 0.10.0
libtpu: 0.0.40
codegen_flags: <defaults>
</compile_context>

<pallas_src>
import numpy as np
import jax
import jax.numpy as jnp
from jax import lax
from jax.experimental import pallas as pl
from jax.experimental.pallas import tpu as pltpu


def previous_power_of_two(n: int) -> int:
    return 2 ** (n.bit_length() - 1)


def _linear_bn_silu(h, wt_ref, gb_ref):
    """Linear (pre-transposed (in,out) weight) -> fused train-mode BatchNorm1d -> SiLU.

    gb_ref packs [gamma; beta] as a (2, out) array.  The Linear bias is intentionally
    omitted: train-mode BatchNorm subtracts the batch mean, which cancels any
    per-feature constant exactly.
    """
    y = jnp.dot(h, wt_ref[...], preferred_element_type=jnp.float32)   # (B, out)
    gb = gb_ref[...]
    gamma = gb[0:1, :]                                                # (1, out)
    beta = gb[1:2, :]                                                 # (1, out)
    mean = jnp.mean(y, axis=0, keepdims=True)                         # (1, out)
    d = y - mean
    var = jnp.mean(d * d, axis=0, keepdims=True)                      # biased, centered
    yhat = d * (gamma * lax.rsqrt(var + 1e-5)) + beta
    return yhat * jax.nn.sigmoid(yhat)                                # SiLU


def gan_kernel(x_ref,
               w1t_ref, gb1_ref,
               w2t_ref, gb2_ref,
               w3t_ref, gb3_ref,
               p_ref,
               out_ref):
    h = x_ref[...]
    h = _linear_bn_silu(h, w1t_ref, gb1_ref)
    h = _linear_bn_silu(h, w2t_ref, gb2_ref)
    z = _linear_bn_silu(h, w3t_ref, gb3_ref)                          # (B, L) latent

    # Dense orthogonal projection: out = z @ P, with P = I - W^T (WW^T+eps I)^{-1} W
    out_ref[...] = jnp.dot(z, p_ref[...], preferred_element_type=jnp.float32)


def _padded_bytes(rows: int, cols: int) -> int:
    """f32 VMEM footprint of a (rows, cols) array padded to (8, 128) tiles."""
    return ((rows + 7) // 8) * 8 * ((cols + 127) // 128) * 128 * 4


def _vmem_limit_bytes(B, input_dim, first, latent):
    # inputs + output + live activations, 2x headroom for buffering/temporaries.
    half = first // 2
    total = (
        _padded_bytes(B, input_dim) + 2 * _padded_bytes(B, first)
        + _padded_bytes(B, half) + 3 * _padded_bytes(B, latent)
        + _padded_bytes(input_dim, first) + _padded_bytes(first, half)
        + _padded_bytes(half, latent) + _padded_bytes(latent, latent)
        + _padded_bytes(2, first) + _padded_bytes(2, half) + _padded_bytes(2, latent)
    )
    # floor 4 MiB, cap below v7x's 64 MiB physical VMEM with headroom.
    return int(min(48 << 20, max(4 << 20, 2 * total)))


def gan_forward_pallas(x, params):
    (w1, b1, g1, be1, w2, b2, g2, be2, w3, b3, g3, be3, wproj) = params
    del b1, b2, b3  # exactly canceled by train-mode BatchNorm mean subtraction

    # ---- hoisted, x-independent projection math (runs once outside the kernel) ----
    W = wproj                                             # (2, L)
    L = W.shape[1]
    WWT = W @ W.T + 1e-5 * jnp.eye(2, dtype=jnp.float32)  # (2, 2)
    a, b_, c, d = WWT[0, 0], WWT[0, 1], WWT[1, 0], WWT[1, 1]
    inv_det = 1.0 / (a * d - b_ * c)
    M = inv_det * jnp.stack([d * W[0] - b_ * W[1],
                             -c * W[0] + a * W[1]], axis=0)           # (2, L) = WWT^{-1} W
    P = jnp.eye(L, dtype=jnp.float32) - W.T @ M                       # (L, L) dense projector

    # ---- pre-transpose encoder weights to (in, out); pack BN gamma/beta per layer ----
    w1t, w2t, w3t = w1.T, w2.T, w3.T
    gb1 = jnp.concatenate([g1, be1], axis=0)              # (2, d1)
    gb2 = jnp.concatenate([g2, be2], axis=0)              # (2, d2)
    gb3 = jnp.concatenate([g3, be3], axis=0)              # (2, L)

    B, input_dim = x.shape
    first = w1.shape[0]
    n_in = 8
    vmem_spec = pl.BlockSpec(memory_space=pltpu.MemorySpace.VMEM)
    return pl.pallas_call(
        gan_kernel,
        out_shape=jax.ShapeDtypeStruct((B, L), jnp.float32),
        in_specs=[vmem_spec] * n_in,
        out_specs=vmem_spec,
        compiler_params=pltpu.CompilerParams(
            vmem_limit_bytes=_vmem_limit_bytes(B, input_dim, first, L)),
    )(x, w1t, gb1, w2t, gb2, w3t, gb3, P)


# ----------------------- deterministic parameter init -----------------------
def kaiming_normal(key, out_dim, in_dim):
    # PyTorch kaiming_normal_(nonlinearity='relu'), fan_in mode: std = sqrt(2/fan_in)
    std = np.sqrt(2.0 / in_dim)
    return jax.random.normal(key, (out_dim, in_dim), dtype=jnp.float32) * std


def build_params(key, input_dim, latent_dim):
    first = previous_power_of_two(input_dim)              # encoder layer sizes
    dims = [(input_dim, first), (first, first // 2), (first // 2, latent_dim)]
    keys = jax.random.split(key, len(dims) + 2)
    params = []
    for i, (din, dout) in enumerate(dims):
        w = kaiming_normal(keys[i], dout, din)             # Linear weight (out, in)
        b = jnp.zeros((1, dout), jnp.float32)              # Linear bias  = 0
        g = jnp.ones((1, dout), jnp.float32)               # BN gamma     = 1
        be = jnp.zeros((1, dout), jnp.float32)             # BN beta      = 0
        params += [w, b, g, be]
    w_age = kaiming_normal(keys[-2], 1, latent_dim)
    w_bmi = kaiming_normal(keys[-1], 1, latent_dim)
    wproj = jnp.concatenate([w_age, w_bmi], axis=0)        # (2, latent)
    params.append(wproj)
    return params


# ------------------------------ pure-JAX reference ---------------------------
def gan_forward_ref(x, params):
    (w1, b1, g1, be1, w2, b2, g2, be2, w3, b3, g3, be3, wproj) = params

    def block(h, w, b, g, be):
        y = h @ w.T + b
        mean = jnp.mean(y, axis=0, keepdims=True)
        var = jnp.mean((y - mean) ** 2, axis=0, keepdims=True)
        yhat = (y - mean) / jnp.sqrt(var + 1e-5) * g + be
        return yhat * jax.nn.sigmoid(yhat)

    z = block(block(block(x, w1, b1, g1, be1), w2, b2, g2, be2), w3, b3, g3, be3)
    W = wproj
    WWT = W @ W.T + 1e-5 * jnp.eye(2, dtype=jnp.float32)
    WWT_inv = jnp.linalg.inv(WWT)
    P = jnp.eye(W.shape[1], dtype=jnp.float32) - W.T @ WWT_inv @ W
    return z @ P


if __name__ == "__main__":
    B, INPUT_DIM, LATENT_DIM = 8, 48, 32
    key = jax.random.PRNGKey(0)
    kx, kp = jax.random.split(key)
    x = jax.random.normal(kx, (B, INPUT_DIM), dtype=jnp.float32)
    params = build_params(kp, INPUT_DIM, LATENT_DIM)

    out = gan_forward_pallas(x, params)
    out = jax.block_until_ready(out)

    ref = jax.block_until_ready(gan_forward_ref(x, params))
    assert out.shape == (B, LATENT_DIM)
    np.testing.assert_allclose(np.asarray(out), np.asarray(ref), rtol=1e-4, atol=1e-4)
    print("KERNEL_OK")
</pallas_src>

<mosaic_0001>
module attributes {stable_mosaic.version = 11 : i64} {
  func.func @gan_kernel(%arg0: memref<8x48xf32, #tpu.memory_space<vmem>>, %arg1: memref<48x32xf32, #tpu.memory_space<vmem>>, %arg2: memref<2x32xf32, #tpu.memory_space<vmem>>, %arg3: memref<32x16xf32, #tpu.memory_space<vmem>>, %arg4: memref<2x16xf32, #tpu.memory_space<vmem>>, %arg5: memref<16x32xf32, #tpu.memory_space<vmem>>, %arg6: memref<2x32xf32, #tpu.memory_space<vmem>>, %arg7: memref<32x32xf32, #tpu.memory_space<vmem>>, %arg8: memref<8x32xf32, #tpu.memory_space<vmem>>) attributes {dimension_semantics = [], scalar_prefetch = 0 : i64, scratch_operands = 0 : i64, tpu.core_type = #tpu.core_type<tc>} {
    %c0 = arith.constant 0 : index
    %c0_0 = arith.constant 0 : index
    %0 = vector.load %arg0[%c0, %c0_0] : memref<8x48xf32, #tpu.memory_space<vmem>>, vector<8x48xf32>
    %c0_1 = arith.constant 0 : index
    %c0_2 = arith.constant 0 : index
    %1 = vector.load %arg1[%c0_1, %c0_2] : memref<48x32xf32, #tpu.memory_space<vmem>>, vector<48x32xf32>
    %cst = arith.constant dense<0.000000e+00> : vector<8x32xf32>
    %2 = tpu.matmul %0, %1, %cst {dimension_numbers = #tpu.dot_dimension_numbers<[1], [0], [0], [1], [0, 0, 1, 1], [], []>} : vector<8x48xf32>, vector<48x32xf32>, vector<8x32xf32> -> vector<8x32xf32>
    %c0_3 = arith.constant 0 : index
    %c0_4 = arith.constant 0 : index
    %3 = vector.load %arg2[%c0_3, %c0_4] : memref<2x32xf32, #tpu.memory_space<vmem>>, vector<2x32xf32>
    %4 = vector.extract_strided_slice %3 {offsets = [0, 0], sizes = [1, 32], strides = [1, 1]} : vector<2x32xf32> to vector<1x32xf32>
    %5 = vector.extract_strided_slice %3 {offsets = [1, 0], sizes = [1, 32], strides = [1, 1]} : vector<2x32xf32> to vector<1x32xf32>
    %cst_5 = arith.constant dense<0.000000e+00> : vector<32xf32>
    %6 = vector.multi_reduction <add>, %2, %cst_5 [0] : vector<8x32xf32> to vector<32xf32>
    %7 = vector.shape_cast %6 : vector<32xf32> to vector<1x32xf32>
    %cst_6 = arith.constant 8.000000e+00 : f32
    %8 = vector.broadcast %cst_6 : f32 to vector<1x32xf32>
    %9 = arith.divf %7, %8 : vector<1x32xf32>
    %10 = vector.broadcast %9 : vector<1x32xf32> to vector<8x32xf32>
    %11 = arith.subf %2, %10 : vector<8x32xf32>
    %12 = arith.mulf %11, %11 : vector<8x32xf32>
    %cst_7 = arith.constant dense<0.000000e+00> : vector<32xf32>
    %13 = vector.multi_reduction <add>, %12, %cst_7 [0] : vector<8x32xf32> to vector<32xf32>
    %14 = vector.shape_cast %13 : vector<32xf32> to vector<1x32xf32>
    %cst_8 = arith.constant 8.000000e+00 : f32
    %15 = vector.broadcast %cst_8 : f32 to vector<1x32xf32>
    %16 = arith.divf %14, %15 : vector<1x32xf32>
    %cst_9 = arith.constant 9.99999974E-6 : f32
    %17 = vector.broadcast %cst_9 : f32 to vector<1x32xf32>
    %18 = arith.addf %16, %17 : vector<1x32xf32>
    %19 = math.rsqrt %18 : vector<1x32xf32>
    %20 = arith.mulf %4, %19 : vector<1x32xf32>
    %21 = vector.broadcast %20 : vector<1x32xf32> to vector<8x32xf32>
    %22 = arith.mulf %11, %21 : vector<8x32xf32>
    %23 = vector.broadcast %5 : vector<1x32xf32> to vector<8x32xf32>
    %24 = arith.addf %22, %23 : vector<8x32xf32>
    %25 = arith.negf %24 : vector<8x32xf32>
    %26 = math.exp %25 : vector<8x32xf32>
    %cst_10 = arith.constant 1.000000e+00 : f32
    %27 = vector.broadcast %cst_10 : f32 to vector<8x32xf32>
    %28 = arith.addf %27, %26 : vector<8x32xf32>
    %29 = arith.divf %27, %28 : vector<8x32xf32>
    %30 = arith.mulf %24, %29 : vector<8x32xf32>
    %c0_11 = arith.constant 0 : index
    %c0_12 = arith.constant 0 : index
    %31 = vector.load %arg3[%c0_11, %c0_12] : memref<32x16xf32, #tpu.memory_space<vmem>>, vector<32x16xf32>
    %cst_13 = arith.constant dense<0.000000e+00> : vector<8x16xf32>
    %32 = tpu.matmul %30, %31, %cst_13 {dimension_numbers = #tpu.dot_dimension_numbers<[1], [0], [0], [1], [0, 0, 1, 1], [], []>} : vector<8x32xf32>, vector<32x16xf32>, vector<8x16xf32> -> vector<8x16xf32>
    %c0_14 = arith.constant 0 : index
    %c0_15 = arith.constant 0 : index
    %33 = vector.load %arg4[%c0_14, %c0_15] : memref<2x16xf32, #tpu.memory_space<vmem>>, vector<2x16xf32>
    %34 = vector.extract_strided_slice %33 {offsets = [0, 0], sizes = [1, 16], strides = [1, 1]} : vector<2x16xf32> to vector<1x16xf32>
    %35 = vector.extract_strided_slice %33 {offsets = [1, 0], sizes = [1, 16], strides = [1, 1]} : vector<2x16xf32> to vector<1x16xf32>
    %cst_16 = arith.constant dense<0.000000e+00> : vector<16xf32>
    %36 = vector.multi_reduction <add>, %32, %cst_16 [0] : vector<8x16xf32> to vector<16xf32>
    %37 = vector.shape_cast %36 : vector<16xf32> to vector<1x16xf32>
    %cst_17 = arith.constant 8.000000e+00 : f32
    %38 = vector.broadcast %cst_17 : f32 to vector<1x16xf32>
    %39 = arith.divf %37, %38 : vector<1x16xf32>
    %40 = vector.broadcast %39 : vector<1x16xf32> to vector<8x16xf32>
    %41 = arith.subf %32, %40 : vector<8x16xf32>
    %42 = arith.mulf %41, %41 : vector<8x16xf32>
    %cst_18 = arith.constant dense<0.000000e+00> : vector<16xf32>
    %43 = vector.multi_reduction <add>, %42, %cst_18 [0] : vector<8x16xf32> to vector<16xf32>
    %44 = vector.shape_cast %43 : vector<16xf32> to vector<1x16xf32>
    %cst_19 = arith.constant 8.000000e+00 : f32
    %45 = vector.broadcast %cst_19 : f32 to vector<1x16xf32>
    %46 = arith.divf %44, %45 : vector<1x16xf32>
    %cst_20 = arith.constant 9.99999974E-6 : f32
    %47 = vector.broadcast %cst_20 : f32 to vector<1x16xf32>
    %48 = arith.addf %46, %47 : vector<1x16xf32>
    %49 = math.rsqrt %48 : vector<1x16xf32>
    %50 = arith.mulf %34, %49 : vector<1x16xf32>
    %51 = vector.broadcast %50 : vector<1x16xf32> to vector<8x16xf32>
    %52 = arith.mulf %41, %51 : vector<8x16xf32>
    %53 = vector.broadcast %35 : vector<1x16xf32> to vector<8x16xf32>
    %54 = arith.addf %52, %53 : vector<8x16xf32>
    %55 = arith.negf %54 : vector<8x16xf32>
    %56 = math.exp %55 : vector<8x16xf32>
    %cst_21 = arith.constant 1.000000e+00 : f32
    %57 = vector.broadcast %cst_21 : f32 to vector<8x16xf32>
    %58 = arith.addf %57, %56 : vector<8x16xf32>
    %59 = arith.divf %57, %58 : vector<8x16xf32>
    %60 = arith.mulf %54, %59 : vector<8x16xf32>
    %c0_22 = arith.constant 0 : index
    %c0_23 = arith.constant 0 : index
    %61 = vector.load %arg5[%c0_22, %c0_23] : memref<16x32xf32, #tpu.memory_space<vmem>>, vector<16x32xf32>
    %cst_24 = arith.constant dense<0.000000e+00> : vector<8x32xf32>
    %62 = tpu.matmul %60, %61, %cst_24 {dimension_numbers = #tpu.dot_dimension_numbers<[1], [0], [0], [1], [0, 0, 1, 1], [], []>} : vector<8x16xf32>, vector<16x32xf32>, vector<8x32xf32> -> vector<8x32xf32>
    %c0_25 = arith.constant 0 : index
    %c0_26 = arith.constant 0 : index
    %63 = vector.load %arg6[%c0_25, %c0_26] : memref<2x32xf32, #tpu.memory_space<vmem>>, vector<2x32xf32>
    %64 = vector.extract_strided_slice %63 {offsets = [0, 0], sizes = [1, 32], strides = [1, 1]} : vector<2x32xf32> to vector<1x32xf32>
    %65 = vector.extract_strided_slice %63 {offsets = [1, 0], sizes = [1, 32], strides = [1, 1]} : vector<2x32xf32> to vector<1x32xf32>
    %cst_27 = arith.constant dense<0.000000e+00> : vector<32xf32>
    %66 = vector.multi_reduction <add>, %62, %cst_27 [0] : vector<8x32xf32> to vector<32xf32>
    %67 = vector.shape_cast %66 : vector<32xf32> to vector<1x32xf32>
    %cst_28 = arith.constant 8.000000e+00 : f32
    %68 = vector.broadcast %cst_28 : f32 to vector<1x32xf32>
    %69 = arith.divf %67, %68 : vector<1x32xf32>
    %70 = vector.broadcast %69 : vector<1x32xf32> to vector<8x32xf32>
    %71 = arith.subf %62, %70 : vector<8x32xf32>
    %72 = arith.mulf %71, %71 : vector<8x32xf32>
    %cst_29 = arith.constant dense<0.000000e+00> : vector<32xf32>
    %73 = vector.multi_reduction <add>, %72, %cst_29 [0] : vector<8x32xf32> to vector<32xf32>
    %74 = vector.shape_cast %73 : vector<32xf32> to vector<1x32xf32>
    %cst_30 = arith.constant 8.000000e+00 : f32
    %75 = vector.broadcast %cst_30 : f32 to vector<1x32xf32>
    %76 = arith.divf %74, %75 : vector<1x32xf32>
    %cst_31 = arith.constant 9.99999974E-6 : f32
    %77 = vector.broadcast %cst_31 : f32 to vector<1x32xf32>
    %78 = arith.addf %76, %77 : vector<1x32xf32>
    %79 = math.rsqrt %78 : vector<1x32xf32>
    %80 = arith.mulf %64, %79 : vector<1x32xf32>
    %81 = vector.broadcast %80 : vector<1x32xf32> to vector<8x32xf32>
    %82 = arith.mulf %71, %81 : vector<8x32xf32>
    %83 = vector.broadcast %65 : vector<1x32xf32> to vector<8x32xf32>
    %84 = arith.addf %82, %83 : vector<8x32xf32>
    %85 = arith.negf %84 : vector<8x32xf32>
    %86 = math.exp %85 : vector<8x32xf32>
    %cst_32 = arith.constant 1.000000e+00 : f32
    %87 = vector.broadcast %cst_32 : f32 to vector<8x32xf32>
    %88 = arith.addf %87, %86 : vector<8x32xf32>
    %89 = arith.divf %87, %88 : vector<8x32xf32>
    %90 = arith.mulf %84, %89 : vector<8x32xf32>
    %c0_33 = arith.constant 0 : index
    %c0_34 = arith.constant 0 : index
    %91 = vector.load %arg7[%c0_33, %c0_34] : memref<32x32xf32, #tpu.memory_space<vmem>>, vector<32x32xf32>
    %cst_35 = arith.constant dense<0.000000e+00> : vector<8x32xf32>
    %92 = tpu.matmul %90, %91, %cst_35 {dimension_numbers = #tpu.dot_dimension_numbers<[1], [0], [0], [1], [0, 0, 1, 1], [], []>} : vector<8x32xf32>, vector<32x32xf32>, vector<8x32xf32> -> vector<8x32xf32>
    %c0_36 = arith.constant 0 : index
    %c0_37 = arith.constant 0 : index
    %93 = vector.load %arg8[%c0_36, %c0_37] : memref<8x32xf32, #tpu.memory_space<vmem>>, vector<8x32xf32>
    tpu.vector_store %arg8[%c0_36, %c0_37], %92 {strides = array<i32>} : memref<8x32xf32, #tpu.memory_space<vmem>>, vector<8x32xf32>,
    return
  }
}

</mosaic_0001>

<llo_original>
// kernel: tpu_custom_call.1
$region0: #{tpu_custom_call.1}
  #allocation0 [shape = 'u32[]', space=smem, size = 0x4, offset = 0x4, fixed_abs, tag = 'smem constant byte address 0x4 - core index']
  #allocation1 [shape = 'u32[144,128]{1,0:T(1,128)}', space=vmem, size = 0x12000, scoped, tag = 'internal scratch']
  %s0 = inlined_call_operand.vmem [shape: f32[8,48], index: 0, kind: input, shape index: {}]
  %s1 = inlined_call_operand.vmem [shape: f32[48,32], index: 1, kind: input, shape index: {}]
  %s2 = inlined_call_operand.vmem [shape: f32[2,32], index: 2, kind: input, shape index: {}]
  %s3 = inlined_call_operand.vmem [shape: f32[32,16], index: 3, kind: input, shape index: {}]
  %s4 = inlined_call_operand.vmem [shape: f32[2,16], index: 4, kind: input, shape index: {}]
  %s5 = inlined_call_operand.vmem [shape: f32[16,32], index: 5, kind: input, shape index: {}]
  %s6 = inlined_call_operand.vmem [shape: f32[2,32], index: 6, kind: input, shape index: {}]
  %s7 = inlined_call_operand.vmem [shape: f32[32,32], index: 7, kind: input, shape index: {}]
  %s8 = inlined_call_operand.hbm [shape: f32[8,32], index: 8, kind: output, shape index: {}]
  %s9 = sld [smem:[#allocation0]]
  $region42: #{tpu_custom_call.1} parent=0
    _
  %s11 = ssub.s32 1, %s9
  %s12 = scalar_select 0, %s11, %s9
  $region1: #{tpu_custom_call.1} parent=0
    #allocation2 [shape = 'u8[4096]{0}', space=vmem, size = 0x1000, scoped, tag = 'output window, operand 0, single buffered']
    #allocation3 [shape = 's32[1]{0}', space=sflag, size = 0x4, scoped, tag = 'scoped memory for tpu_custom_call.1']
    %13 = vsyncpa [#allocation3], 0
    // Predicated region
    $region2: #{tpu_custom_call.1} parent=1 // pred_check
      _
    $region3: #{tpu_custom_call.1} parent=1 // pred_check_branch
      %15 = sbr.rel (0) target = $region5
    $region4: #{tpu_custom_call.1} parent=1 // pred_region
      _
    $region5: #{tpu_custom_call.1} parent=1 // pred_fallthru
      _
    // Predicated region
    $region6: #{tpu_custom_call.1} parent=1 // pred_check
      _
    $region7: #{tpu_custom_call.1} parent=1 // pred_check_branch
      %17 = sbr.rel (0) target = $region9
    $region8: #{tpu_custom_call.1} parent=1 // pred_region
      _
    $region9: #{tpu_custom_call.1} parent=1 // pred_fallthru
      _
    // Predicated region
    $region10: #{tpu_custom_call.1} parent=1 // pred_check
      _
    $region11: #{tpu_custom_call.1} parent=1 // pred_check_branch
      %19 = sbr.rel (0) target = $region13
    $region12: #{tpu_custom_call.1} parent=1 // pred_region
      _
    $region13: #{tpu_custom_call.1} parent=1 // pred_fallthru
      _
    // Predicated region
    $region14: #{tpu_custom_call.1} parent=1 // pred_check
      _
    $region15: #{tpu_custom_call.1} parent=1 // pred_check_branch
      %21 = sbr.rel (0) target = $region17
    $region16: #{tpu_custom_call.1} parent=1 // pred_region
      _
    $region17: #{tpu_custom_call.1} parent=1 // pred_fallthru
      _
    // Predicated region
    $region18: #{tpu_custom_call.1} parent=1 // pred_check
      _
    $region19: #{tpu_custom_call.1} parent=1 // pred_check_branch
      %23 = sbr.rel (0) target = $region21
    $region20: #{tpu_custom_call.1} parent=1 // pred_region
      _
    $region21: #{tpu_custom_call.1} parent=1 // pred_fallthru
      _
    // Predicated region
    $region22: #{tpu_custom_call.1} parent=1 // pred_check
      _
    $region23: #{tpu_custom_call.1} parent=1 // pred_check_branch
      %25 = sbr.rel (0) target = $region25
    $region24: #{tpu_custom_call.1} parent=1 // pred_region
      _
    $region25: #{tpu_custom_call.1} parent=1 // pred_fallthru
      _
    // Predicated region
    $region26: #{tpu_custom_call.1} parent=1 // pred_check
      _
    $region27: #{tpu_custom_call.1} parent=1 // pred_check_branch
      %27 = sbr.rel (0) target = $region29
    $region28: #{tpu_custom_call.1} parent=1 // pred_region
      _
    $region29: #{tpu_custom_call.1} parent=1 // pred_fallthru
      _
    // Predicated region
    $region30: #{tpu_custom_call.1} parent=1 // pred_check
      _
    $region31: #{tpu_custom_call.1} parent=1 // pred_check_branch
      %29 = sbr.rel (0) target = $region33
    $region32: #{tpu_custom_call.1} parent=1 // pred_region
      _
    $region33: #{tpu_custom_call.1} parent=1 // pred_fallthru
      _
    %v30 = vld [vmem:[%s0] sm:$0xff]
    %v31 = vld [vmem:[%s1] sm:$0xff]
    %v32 = vld [vmem:[%s1 + $0x8] sm:$0xff]
    %v33 = vld [vmem:[%s1 + $0x10] sm:$0xff]
    %v34 = vld [vmem:[%s1 + $0x18] sm:$0xff]
    %v35 = vld [vmem:[%s1 + $0x20] sm:$0xff]
    %v36 = vld [vmem:[%s1 + $0x28] sm:$0xff]
    %vm37 = vcmask 392192
    %v39 = vsel %vm37, %v30, 0
    %41 = vmatprep.subr.mxu0 0.0
    %42 = vmatpush1.msra.mxu0 0.0
    %43 = vmatprep.subr.mxu0 0.0
    %44 = vmatpush1.msra.mxu0 0.0
    %45 = vmatprep.subr.mxu0 0.0
    %46 = vmatpush1.msra.mxu0 0.0
    %47 = vmatprep.subr.mxu0 0.0
    %48 = vmatpush1.msra.mxu0 0.0
    %49 = vmatprep.subr.mxu0 0.0
    %50 = vmatpush1.msra.mxu0 0.0
    %51 = vmatprep.subr.mxu0 0.0
    %52 = vmatpush1.msra.mxu0 0.0
    %53 = vmatprep.subr.mxu0 0.0
    %54 = vmatpush1.msra.mxu0 0.0
    %55 = vmatprep.subr.mxu0 0.0
    %56 = vmatpush1.msra.mxu0 0.0
    %57 = vmatprep.subr.mxu0 0.0
    %58 = vmatpush1.msra.mxu0 0.0
    %59 = vmatprep.subr.mxu0 0.0
    %60 = vmatpush1.msra.mxu0 0.0
    %61 = vmatprep.subr.mxu0 0.0
    %62 = vmatpush1.msra.mxu0 %v36
    %63 = vmatprep.subr.mxu0 0.0
    %64 = vmatpush1.msra.mxu0 %v35
    %65 = vmatprep.subr.mxu0 0.0
    %66 = vmatpush1.msra.mxu0 %v34
    %67 = vmatprep.subr.mxu0 0.0
    %68 = vmatpush1.msra.mxu0 %v33
    %69 = vmatprep.subr.mxu0 0.0
    %70 = vmatpush1.msra.mxu0 %v32
    %71 = vmatprep.subr.mxu0 0.0
    %72 = vmatpush1.msra.mxu0 %v31
    %73 = vmatprep.subr.mxu0 0.0
    %74 = vmatpush2.msra.mxu0 0.0
    %75 = vmatprep.subr.mxu0 0.0
    %76 = vmatpush2.msra.mxu0 0.0
    %77 = vmatprep.subr.mxu0 0.0
    %78 = vmatpush2.msra.mxu0 0.0
    %79 = vmatprep.subr.mxu0 0.0
    %80 = vmatpush2.msra.mxu0 0.0
    %81 = vmatprep.subr.mxu0 0.0
    %82 = vmatpush2.msra.mxu0 0.0
    %83 = vmatprep.subr.mxu0 0.0
    %84 = vmatpush2.msra.mxu0 0.0
    %85 = vmatprep.subr.mxu0 0.0
    %86 = vmatpush2.msra.mxu0 0.0
    %87 = vmatprep.subr.mxu0 0.0
    %88 = vmatpush2.msra.mxu0 0.0
    %89 = vmatprep.subr.mxu0 0.0
    %90 = vmatpush2.msra.mxu0 0.0
    %91 = vmatprep.subr.mxu0 0.0
    %92 = vmatpush2.msra.mxu0 0.0
    %93 = vmatprep.subr.mxu0 0.0
    %94 = vmatpush2.msra.mxu0 0.0
    %95 = vmatprep.subr.mxu0 0.0
    %96 = vmatpush2.msra.mxu0 0.0
    %97 = vmatprep.subr.mxu0 0.0
    %98 = vmatpush2.msra.mxu0 0.0
    %99 = vmatprep.subr.mxu0 0.0
    %100 = vmatpush2.msra.mxu0 0.0
    %101 = vmatprep.subr.mxu0 0.0
    %102 = vmatpush2.msra.mxu0 0.0
    %103 = vmatprep.subr.mxu0 0.0
    %104 = vmatpush2.msra.mxu0 0.0
    %105 = vmatprep.mubr.f32.mxu0 0.0
    %106 = vmatmul.mubr.f32.gmra.mxu0 %v39
    %v107 = vpop.f32.mrf.mxu0
    %v108 = vadd.f32 0.0, %v107
    %v109 = vpop.f32.mrf.mxu0
    %110 = vdwg.mxu0
    %v111 = vld [vmem:[%s2] sm:$0x3]
    %vm112 = vcmask 261120
    %v113 = vsel %vm112, %v108, 0.0
    %v114 = vrot.slane %v113, 4
    %v115 = vadd.f32 %v113, %v114
    %v116 = vrot.slane %v115, 2
    %v117 = vadd.f32 %v115, %v116
    %v118 = vrot.slane %v117, 1
    %v119 = vadd.f32 %v117, %v118
    %v120 = vrcp.pop 8.0
    %v121 = vmul.f32 %v119, %v120
    %v122 = vsub.f32 %v108, %v121
    %v123 = vmul.f32 %v122, %v122
    %v124 = vsel %vm112, %v123, 0.0
    %v125 = vrot.slane %v124, 4
    %v126 = vadd.f32 %v124, %v125
    %v127 = vrot.slane %v126, 2
    %v128 = vadd.f32 %v126, %v127
    %v129 = vrot.slane %v128, 1
    %v130 = vadd.f32 %v128, %v129
    %v131 = vmul.f32 %v130, %v120
    %v132 = vadd.f32 %v131, 1e-05
    %v133 = vrsqrt.pop %v132
    %v134 = vmul.f32 %v111, %v133
    %v135 = vlaneseq
    %v136 = vshrl.u32 %v135, 7
    %v137 = vsub.s32 0, %v136
    %v138 = vrot.slane %v134, %v137
    %v139 = vmul.f32 %v122, %v138
    %v140 = vlaneseq
    %v141 = vshrl.u32 %v140, 7
    %v142 = vsub.s32 1, %v141
    %v143 = vrot.slane %v111, %v142
    %v144 = vadd.f32 %v139, %v143
    %v145 = vxor.u32 %v144, 2147483648
    %v146 = vmul.f32 %v145, 1.442695
    %v147 = vpow.pop %v146
    %v148 = vadd.f32 %v147, 1.0
    %v149 = vrcp.pop %v148
    %v150 = vmul.f32 1.0, %v149
    %v151 = vmul.f32 %v144, %v150
    %v152 = vld [vmem:[%s3] sm:$0xff]
    %v153 = vld [vmem:[%s3 + $0x8] sm:$0xff]
    %v154 = vld [vmem:[%s3 + $0x10] sm:$0xff]
    %v155 = vld [vmem:[%s3 + $0x18] sm:$0xff]
    %v157 = vsel %vm112, %v151, 0
    %159 = vmatprep.subr.mxu0 0.0
    %160 = vmatpush1.msra.mxu0 0.0
    %161 = vmatprep.subr.mxu0 0.0
    %162 = vmatpush1.msra.mxu0 0.0
    %163 = vmatprep.subr.mxu0 0.0
    %164 = vmatpush1.msra.mxu0 0.0
    %165 = vmatprep.subr.mxu0 0.0
    %166 = vmatpush1.msra.mxu0 0.0
    %167 = vmatprep.subr.mxu0 0.0
    %168 = vmatpush1.msra.mxu0 0.0
    %169 = vmatprep.subr.mxu0 0.0
    %170 = vmatpush1.msra.mxu0 0.0
    %171 = vmatprep.subr.mxu0 0.0
    %172 = vmatpush1.msra.mxu0 0.0
    %173 = vmatprep.subr.mxu0 0.0
    %174 = vmatpush1.msra.mxu0 0.0
    %175 = vmatprep.subr.mxu0 0.0
    %176 = vmatpush1.msra.mxu0 0.0
    %177 = vmatprep.subr.mxu0 0.0
    %178 = vmatpush1.msra.mxu0 0.0
    %179 = vmatprep.subr.mxu0 0.0
    %180 = vmatpush1.msra.mxu0 0.0
    %181 = vmatprep.subr.mxu0 0.0
    %182 = vmatpush1.msra.mxu0 0.0
    %183 = vmatprep.subr.mxu0 0.0
    %184 = vmatpush1.msra.mxu0 %v155
    %185 = vmatprep.subr.mxu0 0.0
    %186 = vmatpush1.msra.mxu0 %v154
    %187 = vmatprep.subr.mxu0 0.0
    %188 = vmatpush1.msra.mxu0 %v153
    %189 = vmatprep.subr.mxu0 0.0
    %190 = vmatpush1.msra.mxu0 %v152
    %191 = vmatprep.subr.mxu0 0.0
    %192 = vmatpush2.msra.mxu0 0.0
    %193 = vmatprep.subr.mxu0 0.0
    %194 = vmatpush2.msra.mxu0 0.0
    %195 = vmatprep.subr.mxu0 0.0
    %196 = vmatpush2.msra.mxu0 0.0
    %197 = vmatprep.subr.mxu0 0.0
    %198 = vmatpush2.msra.mxu0 0.0
    %199 = vmatprep.subr.mxu0 0.0
    %200 = vmatpush2.msra.mxu0 0.0
    %201 = vmatprep.subr.mxu0 0.0
    %202 = vmatpush2.msra.mxu0 0.0
    %203 = vmatprep.subr.mxu0 0.0
    %204 = vmatpush2.msra.mxu0 0.0
    %205 = vmatprep.subr.mxu0 0.0
    %206 = vmatpush2.msra.mxu0 0.0
    %207 = vmatprep.subr.mxu0 0.0
    %208 = vmatpush2.msra.mxu0 0.0
    %209 = vmatprep.subr.mxu0 0.0
    %210 = vmatpush2.msra.mxu0 0.0
    %211 = vmatprep.subr.mxu0 0.0
    %212 = vmatpush2.msra.mxu0 0.0
    %213 = vmatprep.subr.mxu0 0.0
    %214 = vmatpush2.msra.mxu0 0.0
    %215 = vmatprep.subr.mxu0 0.0
    %216 = vmatpush2.msra.mxu0 0.0
    %217 = vmatprep.subr.mxu0 0.0
    %218 = vmatpush2.msra.mxu0 0.0
    %219 = vmatprep.subr.mxu0 0.0
    %220 = vmatpush2.msra.mxu0 0.0
    %221 = vmatprep.subr.mxu0 0.0
    %222 = vmatpush2.msra.mxu0 0.0
    %223 = vmatprep.mubr.f32.mxu0 0.0
    %224 = vmatmul.mubr.f32.gmra.mxu0 %v157
    %v225 = vpop.f32.mrf.mxu0
    %v226 = vadd.f32 0.0, %v225
    %v227 = vpop.f32.mrf.mxu0
    %228 = vdwg.mxu0
    %v229 = vld [vmem:[%s4] sm:$0x3]
    %vm230 = vcmask 130048
    %v231 = vsel %vm230, %v226, 0.0
    %v232 = vrot.slane %v231, 4
    %v233 = vadd.f32 %v231, %v232
    %v234 = vrot.slane %v233, 2
    %v235 = vadd.f32 %v233, %v234
    %v236 = vrot.slane %v235, 1
    %v237 = vadd.f32 %v235, %v236
    %v238 = vmul.f32 %v237, %v120
    %v239 = vsub.f32 %v226, %v238
    %v240 = vmul.f32 %v239, %v239
    %v241 = vsel %vm230, %v240, 0.0
    %v242 = vrot.slane %v241, 4
    %v243 = vadd.f32 %v241, %v242
    %v244 = vrot.slane %v243, 2
    %v245 = vadd.f32 %v243, %v244
    %v246 = vrot.slane %v245, 1
    %v247 = vadd.f32 %v245, %v246
    %v248 = vmul.f32 %v247, %v120
    %v249 = vadd.f32 %v248, 1e-05
    %v250 = vrsqrt.pop %v249
    %v251 = vmul.f32 %v229, %v250
    %v252 = vlaneseq
    %v253 = vshrl.u32 %v252, 7
    %v254 = vsub.s32 0, %v253
    %v255 = vrot.slane %v251, %v254
    %v256 = vmul.f32 %v239, %v255
    %v257 = vlaneseq
    %v258 = vshrl.u32 %v257, 7
    %v259 = vsub.s32 1, %v258
    %v260 = vrot.slane %v229, %v259
    %v261 = vadd.f32 %v256, %v260
    %v262 = vxor.u32 %v261, 2147483648
    %v263 = vmul.f32 %v262, 1.442695
    %v264 = vpow.pop %v263
    %v265 = vadd.f32 %v264, 1.0
    %v266 = vrcp.pop %v265
    %v267 = vmul.f32 1.0, %v266
    %v268 = vmul.f32 %v261, %v267
    %v269 = vld [vmem:[%s5] sm:$0xff]
    %v270 = vld [vmem:[%s5 + $0x8] sm:$0xff]
    %v272 = vsel %vm230, %v268, 0
    %274 = vmatprep.subr.mxu0 0.0
    %275 = vmatpush1.msra.mxu0 0.0
    %276 = vmatprep.subr.mxu0 0.0
    %277 = vmatpush1.msra.mxu0 0.0
    %278 = vmatprep.subr.mxu0 0.0
    %279 = vmatpush1.msra.mxu0 0.0
    %280 = vmatprep.subr.mxu0 0.0
    %281 = vmatpush1.msra.mxu0 0.0
    %282 = vmatprep.subr.mxu0 0.0
    %283 = vmatpush1.msra.mxu0 0.0
    %284 = vmatprep.subr.mxu0 0.0
    %285 = vmatpush1.msra.mxu0 0.0
    %286 = vmatprep.subr.mxu0 0.0
    %287 = vmatpush1.msra.mxu0 0.0
    %288 = vmatprep.subr.mxu0 0.0
    %289 = vmatpush1.msra.mxu0 0.0
    %290 = vmatprep.subr.mxu0 0.0
    %291 = vmatpush1.msra.mxu0 0.0
    %292 = vmatprep.subr.mxu0 0.0
    %293 = vmatpush1.msra.mxu0 0.0
    %294 = vmatprep.subr.mxu0 0.0
    %295 = vmatpush1.msra.mxu0 0.0
    %296 = vmatprep.subr.mxu0 0.0
    %297 = vmatpush1.msra.mxu0 0.0
    %298 = vmatprep.subr.mxu0 0.0
    %299 = vmatpush1.msra.mxu0 0.0
    %300 = vmatprep.subr.mxu0 0.0
    %301 = vmatpush1.msra.mxu0 0.0
    %302 = vmatprep.subr.mxu0 0.0
    %303 = vmatpush1.msra.mxu0 %v270
    %304 = vmatprep.subr.mxu0 0.0
    %305 = vmatpush1.msra.mxu0 %v269
    %306 = vmatprep.subr.mxu0 0.0
    %307 = vmatpush2.msra.mxu0 0.0
    %308 = vmatprep.subr.mxu0 0.0
    %309 = vmatpush2.msra.mxu0 0.0
    %310 = vmatprep.subr.mxu0 0.0
    %311 = vmatpush2.msra.mxu0 0.0
    %312 = vmatprep.subr.mxu0 0.0
    %313 = vmatpush2.msra.mxu0 0.0
    %314 = vmatprep.subr.mxu0 0.0
    %315 = vmatpush2.msra.mxu0 0.0
    %316 = vmatprep.subr.mxu0 0.0
    %317 = vmatpush2.msra.mxu0 0.0
    %318 = vmatprep.subr.mxu0 0.0
    %319 = vmatpush2.msra.mxu0 0.0
    %320 = vmatprep.subr.mxu0 0.0
    %321 = vmatpush2.msra.mxu0 0.0
    %322 = vmatprep.subr.mxu0 0.0
    %323 = vmatpush2.msra.mxu0 0.0
    %324 = vmatprep.subr.mxu0 0.0
    %325 = vmatpush2.msra.mxu0 0.0
    %326 = vmatprep.subr.mxu0 0.0
    %327 = vmatpush2.msra.mxu0 0.0
    %328 = vmatprep.subr.mxu0 0.0
    %329 = vmatpush2.msra.mxu0 0.0
    %330 = vmatprep.subr.mxu0 0.0
    %331 = vmatpush2.msra.mxu0 0.0
    %332 = vmatprep.subr.mxu0 0.0
    %333 = vmatpush2.msra.mxu0 0.0
    %334 = vmatprep.subr.mxu0 0.0
    %335 = vmatpush2.msra.mxu0 0.0
    %336 = vmatprep.subr.mxu0 0.0
    %337 = vmatpush2.msra.mxu0 0.0
    %338 = vmatprep.mubr.f32.mxu0 0.0
    %339 = vmatmul.mubr.f32.gmra.mxu0 %v272
    %v340 = vpop.f32.mrf.mxu0
    %v341 = vadd.f32 0.0, %v340
    %v342 = vpop.f32.mrf.mxu0
    %343 = vdwg.mxu0
    %v344 = vld [vmem:[%s6] sm:$0x3]
    %v345 = vsel %vm112, %v341, 0.0
    %v346 = vrot.slane %v345, 4
    %v347 = vadd.f32 %v345, %v346
    %v348 = vrot.slane %v347, 2
    %v349 = vadd.f32 %v347, %v348
    %v350 = vrot.slane %v349, 1
    %v351 = vadd.f32 %v349, %v350
    %v352 = vmul.f32 %v351, %v120
    %v353 = vsub.f32 %v341, %v352
    %v354 = vmul.f32 %v353, %v353
    %v355 = vsel %vm112, %v354, 0.0
    %v356 = vrot.slane %v355, 4
    %v357 = vadd.f32 %v355, %v356
    %v358 = vrot.slane %v357, 2
    %v359 = vadd.f32 %v357, %v358
    %v360 = vrot.slane %v359, 1
    %v361 = vadd.f32 %v359, %v360
    %v362 = vmul.f32 %v361, %v120
    %v363 = vadd.f32 %v362, 1e-05
    %v364 = vrsqrt.pop %v363
    %v365 = vmul.f32 %v344, %v364
    %v366 = vlaneseq
    %v367 = vshrl.u32 %v366, 7
    %v368 = vsub.s32 0, %v367
    %v369 = vrot.slane %v365, %v368
    %v370 = vmul.f32 %v353, %v369
    %v371 = vlaneseq
    %v372 = vshrl.u32 %v371, 7
    %v373 = vsub.s32 1, %v372
    %v374 = vrot.slane %v344, %v373
    %v375 = vadd.f32 %v370, %v374
    %v376 = vxor.u32 %v375, 2147483648
    %v377 = vmul.f32 %v376, 1.442695
    %v378 = vpow.pop %v377
    %v379 = vadd.f32 %v378, 1.0
    %v380 = vrcp.pop %v379
    %v381 = vmul.f32 1.0, %v380
    %v382 = vmul.f32 %v375, %v381
    %v383 = vld [vmem:[%s7] sm:$0xff]
    %v384 = vld [vmem:[%s7 + $0x8] sm:$0xff]
    %v385 = vld [vmem:[%s7 + $0x10] sm:$0xff]
    %v386 = vld [vmem:[%s7 + $0x18] sm:$0xff]
    %v388 = vsel %vm112, %v382, 0
    %390 = vmatprep.subr.mxu0 0.0
    %391 = vmatpush1.msra.mxu0 0.0
    %392 = vmatprep.subr.mxu0 0.0
    %393 = vmatpush1.msra.mxu0 0.0
    %394 = vmatprep.subr.mxu0 0.0
    %395 = vmatpush1.msra.mxu0 0.0
    %396 = vmatprep.subr.mxu0 0.0
    %397 = vmatpush1.msra.mxu0 0.0
    %398 = vmatprep.subr.mxu0 0.0
    %399 = vmatpush1.msra.mxu0 0.0
    %400 = vmatprep.subr.mxu0 0.0
    %401 = vmatpush1.msra.mxu0 0.0
    %402 = vmatprep.subr.mxu0 0.0
    %403 = vmatpush1.msra.mxu0 0.0
    %404 = vmatprep.subr.mxu0 0.0
    %405 = vmatpush1.msra.mxu0 0.0
    %406 = vmatprep.subr.mxu0 0.0
    %407 = vmatpush1.msra.mxu0 0.0
    %408 = vmatprep.subr.mxu0 0.0
    %409 = vmatpush1.msra.mxu0 0.0
    %410 = vmatprep.subr.mxu0 0.0
    %411 = vmatpush1.msra.mxu0 0.0
    %412 = vmatprep.subr.mxu0 0.0
    %413 = vmatpush1.msra.mxu0 0.0
    %414 = vmatprep.subr.mxu0 0.0
    %415 = vmatpush1.msra.mxu0 %v386
    %416 = vmatprep.subr.mxu0 0.0
    %417 = vmatpush1.msra.mxu0 %v385
    %418 = vmatprep.subr.mxu0 0.0
    %419 = vmatpush1.msra.mxu0 %v384
    %420 = vmatprep.subr.mxu0 0.0
    %421 = vmatpush1.msra.mxu0 %v383
    %422 = vmatprep.subr.mxu0 0.0
    %423 = vmatpush2.msra.mxu0 0.0
    %424 = vmatprep.subr.mxu0 0.0
    %425 = vmatpush2.msra.mxu0 0.0
    %426 = vmatprep.subr.mxu0 0.0
    %427 = vmatpush2.msra.mxu0 0.0
    %428 = vmatprep.subr.mxu0 0.0
    %429 = vmatpush2.msra.mxu0 0.0
    %430 = vmatprep.subr.mxu0 0.0
    %431 = vmatpush2.msra.mxu0 0.0
    %432 = vmatprep.subr.mxu0 0.0
    %433 = vmatpush2.msra.mxu0 0.0
    %434 = vmatprep.subr.mxu0 0.0
    %435 = vmatpush2.msra.mxu0 0.0
    %436 = vmatprep.subr.mxu0 0.0
    %437 = vmatpush2.msra.mxu0 0.0
    %438 = vmatprep.subr.mxu0 0.0
    %439 = vmatpush2.msra.mxu0 0.0
    %440 = vmatprep.subr.mxu0 0.0
    %441 = vmatpush2.msra.mxu0 0.0
    %442 = vmatprep.subr.mxu0 0.0
    %443 = vmatpush2.msra.mxu0 0.0
    %444 = vmatprep.subr.mxu0 0.0
    %445 = vmatpush2.msra.mxu0 0.0
    %446 = vmatprep.subr.mxu0 0.0
    %447 = vmatpush2.msra.mxu0 0.0
    %448 = vmatprep.subr.mxu0 0.0
    %449 = vmatpush2.msra.mxu0 0.0
    %450 = vmatprep.subr.mxu0 0.0
    %451 = vmatpush2.msra.mxu0 0.0
    %452 = vmatprep.subr.mxu0 0.0
    %453 = vmatpush2.msra.mxu0 0.0
    %454 = vmatprep.mubr.f32.mxu0 0.0
    %455 = vmatmul.mubr.f32.gmra.mxu0 %v388
    %v456 = vpop.f32.mrf.mxu0
    %v457 = vadd.f32 0.0, %v456
    %v458 = vpop.f32.mrf.mxu0
    %459 = vdwg.mxu0
    %460 = vst.msk [vmem:[#allocation2] sm:$0xff] %vm112, %v457
    // Predicated region
    $region34: #{tpu_custom_call.1} parent=1 // pred_check
      _
    $region35: #{tpu_custom_call.1} parent=1 // pred_check_branch
      %462 = sbr.rel (0) target = $region37
    $region36: #{tpu_custom_call.1} parent=1 // pred_region
      %s464 = ssub.s32 128, 128
      %465 = vsyncadd [#allocation3], %s464
      %s467 = sshll.u32 [#allocation2], 4
      %s468 = int_to_ptr.vmem [resolvable:$true] %s467
      %470 = dma.vmem_to_hbm [thread:$0]  %s468, 128, %s8, [#allocation3]
    $region37: #{tpu_custom_call.1} parent=1 // pred_fallthru
      _
    // Predicated region
    $region38: #{tpu_custom_call.1} parent=1 // pred_check
      _
    $region39: #{tpu_custom_call.1} parent=1 // pred_check_branch
      %472 = sbr.rel (0) target = $region41
    $region40: #{tpu_custom_call.1} parent=1 // pred_region
      %473 = dma.done [#allocation3], 128
    $region41: #{tpu_custom_call.1} parent=1 // pred_fallthru
      _
    %474 = vsyncpa [#allocation3], 1

</llo_original>
